<compile_context>
chip_gen: v7x
topology: tpu7x:2x2x1
jax: 0.10.0
libtpu: 0.0.40
codegen_flags: <defaults>
</compile_context>

<pallas_src>
import functools

import jax
import jax.numpy as jnp
from jax.experimental import pallas as pl
from jax.experimental.pallas import tpu as pltpu

LANE = 128      # TPU lane width: last (output/lane) dims padded to this.
SUBLANE = 8     # f32 sublane width: contraction dim of w0 padded only to this.


def _round_up(x, m):
    return (x + m - 1) // m * m


# ---------------------------------------------------------------------------
# Fused kernel: whole MLP in one invocation.
#   x_ref     : (batch, din_p)                activation input
#   w0_ref    : (din_p, hpad)                 first layer weight (K only sublane-padded)
#   wrest_ref : (n_linear-1, hpad, hpad)      stacked remaining weights
#   b_ref     : (n_linear, 1, hpad)           stacked biases
#   o_ref     : (batch, hpad)                 lane-dense output (sliced outside)
# ---------------------------------------------------------------------------
def _mlp_fused_kernel(x_ref, w0_ref, wrest_ref, b_ref, o_ref, *, n_linear):
    # Layer 0
    h = jnp.dot(x_ref[...], w0_ref[...], preferred_element_type=jnp.float32)
    h = h + b_ref[0]
    if n_linear > 1:
        h = jnp.maximum(h, 0.0)
    # Layers 1 .. n_linear-1 (static unroll; ReLU on all but the final Linear)
    for i in range(1, n_linear):
        h = jnp.dot(h, wrest_ref[i - 1], preferred_element_type=jnp.float32)
        h = h + b_ref[i]
        if i < n_linear - 1:
            h = jnp.maximum(h, 0.0)
    o_ref[...] = h.astype(o_ref.dtype)


# ---------------------------------------------------------------------------
# Parameter init (mimics PyTorch nn.Linear default U(-1/sqrt(fan_in), ...)).
# Weights stored as (in_features, out_features) so y = x @ W + b.
# ---------------------------------------------------------------------------
def init_mlp_params(key, input_n, n_hidden_units, output_n, n_layers,
                    dtype=jnp.float32):
    dims = [input_n] + [n_hidden_units] * (n_layers + 1) + [output_n]
    params = []
    for din, dout in zip(dims[:-1], dims[1:]):
        key, kw, kb = jax.random.split(key, 3)
        bound = float(din) ** -0.5
        w = jax.random.uniform(kw, (din, dout), dtype=dtype,
                               minval=-bound, maxval=bound)
        b = jax.random.uniform(kb, (dout,), dtype=dtype,
                               minval=-bound, maxval=bound)
        params.append((w, b))
    return params


def pack_params_for_kernel(params):
    """Pack params into 3 kernel operands (done once, off the hot path).

    Zero padding is exact for a Linear+ReLU chain: padded input columns are 0,
    padded weight rows/cols are 0, padded bias entries are 0, so padded
    activation columns stay 0 through every layer.
    """
    n_linear = len(params)
    dtype = params[0][0].dtype

    din = params[0][0].shape[0]
    din_p = _round_up(din, SUBLANE)                       # K of w0: sublane only
    hpad = _round_up(max(w.shape[1] for w, _ in params), LANE)  # lane-dense N

    # First weight: (din_p, hpad)
    w0, _ = params[0]
    w0_p = jnp.zeros((din_p, hpad), dtype).at[:din, :w0.shape[1]].set(w0)

    # Remaining weights stacked: (n_linear-1, hpad, hpad).
    # K must be hpad here because the resident activation is hpad lanes wide.
    wrest = jnp.zeros((max(n_linear - 1, 1), hpad, hpad), dtype)
    for i, (w, _) in enumerate(params[1:]):
        ki, ni = w.shape
        wrest = wrest.at[i, :ki, :ni].set(w)

    # All biases stacked: (n_linear, 1, hpad)
    bstack = jnp.zeros((n_linear, 1, hpad), dtype)
    for i, (_, b) in enumerate(params):
        bstack = bstack.at[i, 0, :b.shape[0]].set(b)

    return w0_p, wrest, bstack


# ---------------------------------------------------------------------------
# Fused forward: one pallas_call for the whole MLP (jitted so the final
# lane slice fuses with neighbouring XLA ops).
# ---------------------------------------------------------------------------
@functools.partial(jax.jit, static_argnames=("n_linear", "output_n"))
def mlp_forward_fused(x, w0_p, wrest, bstack, *, n_linear, output_n):
    batch, din = x.shape
    din_p, hpad = w0_p.shape

    # Pad x's feature (lane) dim only if w0's K dim needed sublane padding.
    if din != din_p:
        x = jnp.pad(x, ((0, 0), (0, din_p - din)))

    vmem = pl.BlockSpec(memory_space=pltpu.MemorySpace.VMEM)
    out_p = pl.pallas_call(
        functools.partial(_mlp_fused_kernel, n_linear=n_linear),
        out_shape=jax.ShapeDtypeStruct((batch, hpad), x.dtype),
        in_specs=[vmem, vmem, vmem, vmem],
        out_specs=vmem,
    )(x, w0_p, wrest, bstack)

    return out_p[:, :output_n]


# ---------------------------------------------------------------------------
# Pure-JAX reference for correctness check (unpacked params).
# ---------------------------------------------------------------------------
def mlp_forward_ref(params, x):
    n = len(params)
    for idx, (w, b) in enumerate(params):
        x = x @ w + b
        if idx < n - 1:
            x = jnp.maximum(x, 0.0)
    return x


if __name__ == "__main__":
    # Small shapes consistent with the module's forward.
    batch = 8
    input_n = 16
    n_hidden_units = 32
    output_n = 8
    n_layers = 2

    key = jax.random.PRNGKey(0)
    key, kx = jax.random.split(key)
    x = jax.random.normal(kx, (batch, input_n), dtype=jnp.float32)

    params = init_mlp_params(key, input_n, n_hidden_units, output_n, n_layers)
    w0_p, wrest, bstack = pack_params_for_kernel(params)
    n_linear = len(params)   # = n_layers + 2

    out = mlp_forward_fused(x, w0_p, wrest, bstack,
                            n_linear=n_linear, output_n=output_n)
    out = jax.block_until_ready(out)

    ref = jax.block_until_ready(mlp_forward_ref(params, x))
    assert out.shape == (batch, output_n)
    assert jnp.allclose(out, ref, atol=1e-5, rtol=1e-5)

    print("KERNEL_OK")
</pallas_src>

<mosaic_0001>
module attributes {stable_mosaic.version = 11 : i64} {
  func.func @_mlp_fused_kernel(%arg0: memref<8x16xf32, #tpu.memory_space<vmem>>, %arg1: memref<16x128xf32, #tpu.memory_space<vmem>>, %arg2: memref<3x128x128xf32, #tpu.memory_space<vmem>>, %arg3: memref<4x1x128xf32, #tpu.memory_space<vmem>>, %arg4: memref<8x128xf32, #tpu.memory_space<vmem>>) attributes {dimension_semantics = [], scalar_prefetch = 0 : i64, scratch_operands = 0 : i64, tpu.core_type = #tpu.core_type<tc>} {
    %c0 = arith.constant 0 : index
    %c0_0 = arith.constant 0 : index
    %0 = vector.load %arg0[%c0, %c0_0] : memref<8x16xf32, #tpu.memory_space<vmem>>, vector<8x16xf32>
    %c0_1 = arith.constant 0 : index
    %c0_2 = arith.constant 0 : index
    %1 = vector.load %arg1[%c0_1, %c0_2] : memref<16x128xf32, #tpu.memory_space<vmem>>, vector<16x128xf32>
    %cst = arith.constant dense<0.000000e+00> : vector<8x128xf32>
    %2 = tpu.matmul %0, %1, %cst {dimension_numbers = #tpu.dot_dimension_numbers<[1], [0], [0], [1], [0, 0, 1, 1], [], []>} : vector<8x16xf32>, vector<16x128xf32>, vector<8x128xf32> -> vector<8x128xf32>
    %c0_3 = arith.constant 0 : index
    %c0_4 = arith.constant 0 : index
    %c0_5 = arith.constant 0 : index
    %3 = vector.load %arg3[%c0_3, %c0_4, %c0_5] : memref<4x1x128xf32, #tpu.memory_space<vmem>>, vector<1x1x128xf32>
    %4 = vector.shape_cast %3 : vector<1x1x128xf32> to vector<1x128xf32>
    %5 = vector.broadcast %4 : vector<1x128xf32> to vector<8x128xf32>
    %6 = arith.addf %2, %5 : vector<8x128xf32>
    %cst_6 = arith.constant 0.000000e+00 : f32
    %7 = vector.broadcast %cst_6 : f32 to vector<8x128xf32>
    %8 = arith.maximumf %6, %7 : vector<8x128xf32>
    %c0_7 = arith.constant 0 : index
    %c0_8 = arith.constant 0 : index
    %c0_9 = arith.constant 0 : index
    %9 = vector.load %arg2[%c0_7, %c0_8, %c0_9] : memref<3x128x128xf32, #tpu.memory_space<vmem>>, vector<1x128x128xf32>
    %10 = vector.shape_cast %9 : vector<1x128x128xf32> to vector<128x128xf32>
    %cst_10 = arith.constant dense<0.000000e+00> : vector<8x128xf32>
    %11 = tpu.matmul %8, %10, %cst_10 {dimension_numbers = #tpu.dot_dimension_numbers<[1], [0], [0], [1], [0, 0, 1, 1], [], []>} : vector<8x128xf32>, vector<128x128xf32>, vector<8x128xf32> -> vector<8x128xf32>
    %c1 = arith.constant 1 : index
    %c0_11 = arith.constant 0 : index
    %c0_12 = arith.constant 0 : index
    %12 = vector.load %arg3[%c1, %c0_11, %c0_12] : memref<4x1x128xf32, #tpu.memory_space<vmem>>, vector<1x1x128xf32>
    %13 = vector.shape_cast %12 : vector<1x1x128xf32> to vector<1x128xf32>
    %14 = vector.broadcast %13 : vector<1x128xf32> to vector<8x128xf32>
    %15 = arith.addf %11, %14 : vector<8x128xf32>
    %cst_13 = arith.constant 0.000000e+00 : f32
    %16 = vector.broadcast %cst_13 : f32 to vector<8x128xf32>
    %17 = arith.maximumf %15, %16 : vector<8x128xf32>
    %c1_14 = arith.constant 1 : index
    %c0_15 = arith.constant 0 : index
    %c0_16 = arith.constant 0 : index
    %18 = vector.load %arg2[%c1_14, %c0_15, %c0_16] : memref<3x128x128xf32, #tpu.memory_space<vmem>>, vector<1x128x128xf32>
    %19 = vector.shape_cast %18 : vector<1x128x128xf32> to vector<128x128xf32>
    %cst_17 = arith.constant dense<0.000000e+00> : vector<8x128xf32>
    %20 = tpu.matmul %17, %19, %cst_17 {dimension_numbers = #tpu.dot_dimension_numbers<[1], [0], [0], [1], [0, 0, 1, 1], [], []>} : vector<8x128xf32>, vector<128x128xf32>, vector<8x128xf32> -> vector<8x128xf32>
    %c2 = arith.constant 2 : index
    %c0_18 = arith.constant 0 : index
    %c0_19 = arith.constant 0 : index
    %21 = vector.load %arg3[%c2, %c0_18, %c0_19] : memref<4x1x128xf32, #tpu.memory_space<vmem>>, vector<1x1x128xf32>
    %22 = vector.shape_cast %21 : vector<1x1x128xf32> to vector<1x128xf32>
    %23 = vector.broadcast %22 : vector<1x128xf32> to vector<8x128xf32>
    %24 = arith.addf %20, %23 : vector<8x128xf32>
    %cst_20 = arith.constant 0.000000e+00 : f32
    %25 = vector.broadcast %cst_20 : f32 to vector<8x128xf32>
    %26 = arith.maximumf %24, %25 : vector<8x128xf32>
    %c2_21 = arith.constant 2 : index
    %c0_22 = arith.constant 0 : index
    %c0_23 = arith.constant 0 : index
    %27 = vector.load %arg2[%c2_21, %c0_22, %c0_23] : memref<3x128x128xf32, #tpu.memory_space<vmem>>, vector<1x128x128xf32>
    %28 = vector.shape_cast %27 : vector<1x128x128xf32> to vector<128x128xf32>
    %cst_24 = arith.constant dense<0.000000e+00> : vector<8x128xf32>
    %29 = tpu.matmul %26, %28, %cst_24 {dimension_numbers = #tpu.dot_dimension_numbers<[1], [0], [0], [1], [0, 0, 1, 1], [], []>} : vector<8x128xf32>, vector<128x128xf32>, vector<8x128xf32> -> vector<8x128xf32>
    %c3 = arith.constant 3 : index
    %c0_25 = arith.constant 0 : index
    %c0_26 = arith.constant 0 : index
    %30 = vector.load %arg3[%c3, %c0_25, %c0_26] : memref<4x1x128xf32, #tpu.memory_space<vmem>>, vector<1x1x128xf32>
    %31 = vector.shape_cast %30 : vector<1x1x128xf32> to vector<1x128xf32>
    %32 = vector.broadcast %31 : vector<1x128xf32> to vector<8x128xf32>
    %33 = arith.addf %29, %32 : vector<8x128xf32>
    %c0_27 = arith.constant 0 : index
    %c0_28 = arith.constant 0 : index
    %34 = vector.load %arg4[%c0_27, %c0_28] : memref<8x128xf32, #tpu.memory_space<vmem>>, vector<8x128xf32>
    tpu.vector_store %arg4[%c0_27, %c0_28], %33 {strides = array<i32>} : memref<8x128xf32, #tpu.memory_space<vmem>>, vector<8x128xf32>,
    return
  }
}

</mosaic_0001>

<llo_original>
// kernel: mlp_forward_fused.1
$region0: #{mlp_forward_fused.1}
  #allocation0 [shape = 'u32[]', space=smem, size = 0x4, offset = 0x4, fixed_abs, tag = 'smem constant byte address 0x4 - core index']
  #allocation1 [shape = 'u32[144,128]{1,0:T(1,128)}', space=vmem, size = 0x12000, scoped, tag = 'internal scratch']
  %s0 = inlined_call_operand.hbm [shape: f32[8,16], index: 0, kind: input, shape index: {}]
  %s1 = inlined_call_operand.hbm [shape: f32[16,128], index: 1, kind: input, shape index: {}]
  %s2 = inlined_call_operand.hbm [shape: f32[3,128,128], index: 2, kind: input, shape index: {}]
  %s3 = inlined_call_operand.vmem [shape: f32[4,1,128], index: 3, kind: input, shape index: {}]
  %s4 = inlined_call_operand.hbm [shape: f32[8,128], index: 4, kind: output, shape index: {}]
  %s5 = sld [smem:[#allocation0]]
  $region38: #{mlp_forward_fused.1} parent=0
    _
  %s7 = ssub.s32 1, %s5
  %s8 = scalar_select 0, %s7, %s5
  $region1: #{mlp_forward_fused.1} parent=0
    #allocation2 [shape = 'u8[4096]{0}', space=vmem, size = 0x1000, scoped, tag = 'input window, operand 0, single buffered']
    #allocation3 [shape = 's32[1]{0}', space=sflag, size = 0x4, scoped, tag = 'scoped memory for mlp_forward_fused.1']
    #allocation4 [shape = 's32[1]{0}', space=sflag, size = 0x4, scoped, tag = 'scoped memory for mlp_forward_fused.1']
    #allocation5 [shape = 'u8[8192]{0}', space=vmem, size = 0x2000, scoped, tag = 'input window, operand 1, single buffered']
    #allocation6 [shape = 's32[1]{0}', space=sflag, size = 0x4, scoped, tag = 'scoped memory for mlp_forward_fused.1']
    #allocation7 [shape = 'u8[196608]{0}', space=vmem, size = 0x30000, scoped, tag = 'input window, operand 2, single buffered']
    #allocation8 [shape = 'u8[4096]{0}', space=vmem, size = 0x1000, scoped, tag = 'output window, operand 0, single buffered']
    %9 = vsyncpa [#allocation3], 0
    %10 = vsyncpa [#allocation6], 0
    %11 = vsyncpa [#allocation4], 0
    // Predicated region
    $region2: #{mlp_forward_fused.1} parent=1 // pred_check
      _
    $region3: #{mlp_forward_fused.1} parent=1 // pred_check_branch
      %13 = sbr.rel (0) target = $region5
    $region4: #{mlp_forward_fused.1} parent=1 // pred_region
      %s15 = ssub.s32 128, 128
      %16 = vsyncadd [#allocation3], %s15
      %s18 = sshll.u32 [#allocation2], 4
      %s19 = int_to_ptr.vmem [resolvable:$true] %s18
      %21 = dma.hbm_to_vmem [thread:$0]  %s0, 128, %s19, [#allocation3]
    $region5: #{mlp_forward_fused.1} parent=1 // pred_fallthru
      _
    // Predicated region
    $region6: #{mlp_forward_fused.1} parent=1 // pred_check
      _
    $region7: #{mlp_forward_fused.1} parent=1 // pred_check_branch
      %23 = sbr.rel (0) target = $region9
    $region8: #{mlp_forward_fused.1} parent=1 // pred_region
      %s25 = ssub.s32 256, 256
      %26 = vsyncadd [#allocation6], %s25
      %s27 = sshll.u32 [#allocation5], 4
      %s28 = int_to_ptr.vmem [resolvable:$true] %s27
      %33 = dma.hbm_to_vmem [thread:$0]  %s1, 256, %s28, [#allocation6], 128, 128, 8
    $region9: #{mlp_forward_fused.1} parent=1 // pred_fallthru
      _
    // Predicated region
    $region10: #{mlp_forward_fused.1} parent=1 // pred_check
      _
    $region11: #{mlp_forward_fused.1} parent=1 // pred_check_branch
      %35 = sbr.rel (0) target = $region13
    $region12: #{mlp_forward_fused.1} parent=1 // pred_region
      %s37 = ssub.s32 6144, 6144
      %38 = vsyncadd [#allocation6], %s37
      %s39 = sshll.u32 [#allocation7], 4
      %s40 = int_to_ptr.vmem [resolvable:$true] %s39
      %45 = dma.hbm_to_vmem [thread:$0]  %s2, 6144, %s40, [#allocation6], 128, 128, 8
    $region13: #{mlp_forward_fused.1} parent=1 // pred_fallthru
      _
    // Predicated region
    $region14: #{mlp_forward_fused.1} parent=1 // pred_check
      _
    $region15: #{mlp_forward_fused.1} parent=1 // pred_check_branch
      %47 = sbr.rel (0) target = $region17
    $region16: #{mlp_forward_fused.1} parent=1 // pred_region
      _
    $region17: #{mlp_forward_fused.1} parent=1 // pred_fallthru
      _
    // Predicated region
    $region18: #{mlp_forward_fused.1} parent=1 // pred_check
      _
    $region19: #{mlp_forward_fused.1} parent=1 // pred_check_branch
      %49 = sbr.rel (0) target = $region21
    $region20: #{mlp_forward_fused.1} parent=1 // pred_region
      %50 = dma.done [#allocation3], 128
    $region21: #{mlp_forward_fused.1} parent=1 // pred_fallthru
      _
    // Predicated region
    $region22: #{mlp_forward_fused.1} parent=1 // pred_check
      _
    $region23: #{mlp_forward_fused.1} parent=1 // pred_check_branch
      %52 = sbr.rel (0) target = $region25
    $region24: #{mlp_forward_fused.1} parent=1 // pred_region
      %53 = dma.done [#allocation6], 256
    $region25: #{mlp_forward_fused.1} parent=1 // pred_fallthru
      _
    // Predicated region
    $region26: #{mlp_forward_fused.1} parent=1 // pred_check
      _
    $region27: #{mlp_forward_fused.1} parent=1 // pred_check_branch
      %55 = sbr.rel (0) target = $region29
    $region28: #{mlp_forward_fused.1} parent=1 // pred_region
      %56 = dma.done [#allocation6], 6144
    $region29: #{mlp_forward_fused.1} parent=1 // pred_fallthru
      _
    %v57 = vld [vmem:[#allocation2] sm:$0xff]
    %v58 = vld [vmem:[#allocation5] sm:$0xff]
    %v59 = vld [vmem:[#allocation5 + $0x8] sm:$0xff]
    %v60 = vld [vmem:[%s3] sm:$0x1]
    %v62 = vlaneseq
    %v63 = vshrl.u32 %v62, 7
    %v64 = vsub.s32 0, %v63
    %v65 = vrot.slane %v60, %v64
    %vm67 = vcmask 130048
    %v69 = vsel %vm67, %v57, 0
    %71 = vmatprep.subr.mxu0 0.0
    %72 = vmatpush1.msra.mxu0 %v58
    %73 = vmatprep.subr.mxu0 0.0
    %74 = vmatpush1.msra.mxu0 %v59
    %75 = vmatprep.subr.mxu0 0.0
    %76 = vmatpush1.msra.mxu0 0.0
    %77 = vmatprep.subr.mxu0 0.0
    %78 = vmatpush1.msra.mxu0 0.0
    %79 = vmatprep.subr.mxu0 0.0
    %80 = vmatpush1.msra.mxu0 0.0
    %81 = vmatprep.subr.mxu0 0.0
    %82 = vmatpush1.msra.mxu0 0.0
    %83 = vmatprep.subr.mxu0 0.0
    %84 = vmatpush1.msra.mxu0 0.0
    %85 = vmatprep.subr.mxu0 0.0
    %86 = vmatpush1.msra.mxu0 0.0
    %87 = vmatprep.subr.mxu0 0.0
    %88 = vmatpush1.msra.mxu0 0.0
    %89 = vmatprep.subr.mxu0 0.0
    %90 = vmatpush1.msra.mxu0 0.0
    %91 = vmatprep.subr.mxu0 0.0
    %92 = vmatpush1.msra.mxu0 0.0
    %93 = vmatprep.subr.mxu0 0.0
    %94 = vmatpush1.msra.mxu0 0.0
    %95 = vmatprep.subr.mxu0 0.0
    %96 = vmatpush1.msra.mxu0 0.0
    %97 = vmatprep.subr.mxu0 0.0
    %98 = vmatpush1.msra.mxu0 0.0
    %99 = vmatprep.subr.mxu0 0.0
    %100 = vmatpush1.msra.mxu0 0.0
    %101 = vmatprep.subr.mxu0 0.0
    %102 = vmatpush1.msra.mxu0 0.0
    %103 = vmatprep.subr.mxu0 0.0
    %104 = vmatpush1.msra.mxu0 0.0
    %105 = vmatprep.subr.mxu0 0.0
    %106 = vmatpush1.msra.mxu0 0.0
    %107 = vmatprep.subr.mxu0 0.0
    %108 = vmatpush1.msra.mxu0 0.0
    %109 = vmatprep.subr.mxu0 0.0
    %110 = vmatpush1.msra.mxu0 0.0
    %111 = vmatprep.subr.mxu0 0.0
    %112 = vmatpush1.msra.mxu0 0.0
    %113 = vmatprep.subr.mxu0 0.0
    %114 = vmatpush1.msra.mxu0 0.0
    %115 = vmatprep.subr.mxu0 0.0
    %116 = vmatpush1.msra.mxu0 0.0
    %117 = vmatprep.subr.mxu0 0.0
    %118 = vmatpush1.msra.mxu0 0.0
    %119 = vmatprep.subr.mxu0 0.0
    %120 = vmatpush1.msra.mxu0 0.0
    %121 = vmatprep.subr.mxu0 0.0
    %122 = vmatpush1.msra.mxu0 0.0
    %123 = vmatprep.subr.mxu0 0.0
    %124 = vmatpush1.msra.mxu0 0.0
    %125 = vmatprep.subr.mxu0 0.0
    %126 = vmatpush1.msra.mxu0 0.0
    %127 = vmatprep.subr.mxu0 0.0
    %128 = vmatpush1.msra.mxu0 0.0
    %129 = vmatprep.subr.mxu0 0.0
    %130 = vmatpush1.msra.mxu0 0.0
    %131 = vmatprep.subr.mxu0 0.0
    %132 = vmatpush1.msra.mxu0 0.0
    %133 = vmatprep.subr.mxu0 0.0
    %134 = vmatpush1.msra.mxu0 0.0
    %135 = vmatprep.mubr.f32.mxu0 0.0
    %136 = vmatmul.mubr.f32.gmra.mrb[0].mxu0 %v69
    %v137 = vpop.f32.mrb[0].mxu0
    %v138 = vadd.f32 %v65, %v137
    %v139 = vpop.f32.mrb[0].mxu0
    %140 = vdwg.mxu0
    %v141 = vmax.f32 %v138, 0.0
    %v142 = vld [vmem:[#allocation7] sm:$0xff]
    %v143 = vld [vmem:[#allocation7 + $0x8] sm:$0xff]
    %v144 = vld [vmem:[#allocation7 + $0x10] sm:$0xff]
    %v145 = vld [vmem:[#allocation7 + $0x18] sm:$0xff]
    %v146 = vld [vmem:[#allocation7 + $0x20] sm:$0xff]
    %v147 = vld [vmem:[#allocation7 + $0x28] sm:$0xff]
    %v148 = vld [vmem:[#allocation7 + $0x30] sm:$0xff]
    %v149 = vld [vmem:[#allocation7 + $0x38] sm:$0xff]
    %v150 = vld [vmem:[#allocation7 + $0x40] sm:$0xff]
    %v151 = vld [vmem:[#allocation7 + $0x48] sm:$0xff]
    %v152 = vld [vmem:[#allocation7 + $0x50] sm:$0xff]
    %v153 = vld [vmem:[#allocation7 + $0x58] sm:$0xff]
    %v154 = vld [vmem:[#allocation7 + $0x60] sm:$0xff]
    %v155 = vld [vmem:[#allocation7 + $0x68] sm:$0xff]
    %v156 = vld [vmem:[#allocation7 + $0x70] sm:$0xff]
    %v157 = vld [vmem:[#allocation7 + $0x78] sm:$0xff]
    %s158 = scalar_lea.vmem %s3, 1
    %v159 = vld [vmem:[%s158] sm:$0x1]
    %v161 = vlaneseq
    %v162 = vshrl.u32 %v161, 7
    %v163 = vsub.s32 0, %v162
    %v164 = vrot.slane %v159, %v163
    %166 = vmatprep.subr.mxu0 0.0
    %167 = vmatpush1.msra.mxu0 %v142
    %168 = vmatprep.subr.mxu0 0.0
    %169 = vmatpush1.msra.mxu0 %v143
    %170 = vmatprep.subr.mxu0 0.0
    %171 = vmatpush1.msra.mxu0 %v144
    %172 = vmatprep.subr.mxu0 0.0
    %173 = vmatpush1.msra.mxu0 %v145
    %174 = vmatprep.subr.mxu0 0.0
    %175 = vmatpush1.msra.mxu0 %v146
    %176 = vmatprep.subr.mxu0 0.0
    %177 = vmatpush1.msra.mxu0 %v147
    %178 = vmatprep.subr.mxu0 0.0
    %179 = vmatpush1.msra.mxu0 %v148
    %180 = vmatprep.subr.mxu0 0.0
    %181 = vmatpush1.msra.mxu0 %v149
    %182 = vmatprep.subr.mxu0 0.0
    %183 = vmatpush1.msra.mxu0 %v150
    %184 = vmatprep.subr.mxu0 0.0
    %185 = vmatpush1.msra.mxu0 %v151
    %186 = vmatprep.subr.mxu0 0.0
    %187 = vmatpush1.msra.mxu0 %v152
    %188 = vmatprep.subr.mxu0 0.0
    %189 = vmatpush1.msra.mxu0 %v153
    %190 = vmatprep.subr.mxu0 0.0
    %191 = vmatpush1.msra.mxu0 %v154
    %192 = vmatprep.subr.mxu0 0.0
    %193 = vmatpush1.msra.mxu0 %v155
    %194 = vmatprep.subr.mxu0 0.0
    %195 = vmatpush1.msra.mxu0 %v156
    %196 = vmatprep.subr.mxu0 0.0
    %197 = vmatpush1.msra.mxu0 %v157
    %198 = vmatprep.subr.mxu0 0.0
    %199 = vmatpush1.msra.mxu0 0.0
    %200 = vmatprep.subr.mxu0 0.0
    %201 = vmatpush1.msra.mxu0 0.0
    %202 = vmatprep.subr.mxu0 0.0
    %203 = vmatpush1.msra.mxu0 0.0
    %204 = vmatprep.subr.mxu0 0.0
    %205 = vmatpush1.msra.mxu0 0.0
    %206 = vmatprep.subr.mxu0 0.0
    %207 = vmatpush1.msra.mxu0 0.0
    %208 = vmatprep.subr.mxu0 0.0
    %209 = vmatpush1.msra.mxu0 0.0
    %210 = vmatprep.subr.mxu0 0.0
    %211 = vmatpush1.msra.mxu0 0.0
    %212 = vmatprep.subr.mxu0 0.0
    %213 = vmatpush1.msra.mxu0 0.0
    %214 = vmatprep.subr.mxu0 0.0
    %215 = vmatpush1.msra.mxu0 0.0
    %216 = vmatprep.subr.mxu0 0.0
    %217 = vmatpush1.msra.mxu0 0.0
    %218 = vmatprep.subr.mxu0 0.0
    %219 = vmatpush1.msra.mxu0 0.0
    %220 = vmatprep.subr.mxu0 0.0
    %221 = vmatpush1.msra.mxu0 0.0
    %222 = vmatprep.subr.mxu0 0.0
    %223 = vmatpush1.msra.mxu0 0.0
    %224 = vmatprep.subr.mxu0 0.0
    %225 = vmatpush1.msra.mxu0 0.0
    %226 = vmatprep.subr.mxu0 0.0
    %227 = vmatpush1.msra.mxu0 0.0
    %228 = vmatprep.subr.mxu0 0.0
    %229 = vmatpush1.msra.mxu0 0.0
    %230 = vmatprep.mubr.f32.mxu0 0.0
    %231 = vmatmul.mubr.f32.gmra.mrb[0].mxu0 %v141
    %v232 = vpop.f32.mrb[0].mxu0
    %v233 = vadd.f32 %v164, %v232
    %v234 = vpop.f32.mrb[0].mxu0
    %235 = vdwg.mxu0
    %v236 = vmax.f32 %v233, 0.0
    %s237 = scalar_lea.vmem [#allocation7], 128
    %v238 = vld [vmem:[%s237] sm:$0xff]
    %v239 = vld [vmem:[%s237 + $0x8] sm:$0xff]
    %v240 = vld [vmem:[%s237 + $0x10] sm:$0xff]
    %v241 = vld [vmem:[%s237 + $0x18] sm:$0xff]
    %v242 = vld [vmem:[%s237 + $0x20] sm:$0xff]
    %v243 = vld [vmem:[%s237 + $0x28] sm:$0xff]
    %v244 = vld [vmem:[%s237 + $0x30] sm:$0xff]
    %v245 = vld [vmem:[%s237 + $0x38] sm:$0xff]
    %v246 = vld [vmem:[%s237 + $0x40] sm:$0xff]
    %v247 = vld [vmem:[%s237 + $0x48] sm:$0xff]
    %v248 = vld [vmem:[%s237 + $0x50] sm:$0xff]
    %v249 = vld [vmem:[%s237 + $0x58] sm:$0xff]
    %v250 = vld [vmem:[%s237 + $0x60] sm:$0xff]
    %v251 = vld [vmem:[%s237 + $0x68] sm:$0xff]
    %v252 = vld [vmem:[%s237 + $0x70] sm:$0xff]
    %v253 = vld [vmem:[%s237 + $0x78] sm:$0xff]
    %s254 = scalar_lea.vmem %s3, 2
    %v255 = vld [vmem:[%s254] sm:$0x1]
    %v257 = vlaneseq
    %v258 = vshrl.u32 %v257, 7
    %v259 = vsub.s32 0, %v258
    %v260 = vrot.slane %v255, %v259
    %262 = vmatprep.subr.mxu0 0.0
    %263 = vmatpush1.msra.mxu0 %v238
    %264 = vmatprep.subr.mxu0 0.0
    %265 = vmatpush1.msra.mxu0 %v239
    %266 = vmatprep.subr.mxu0 0.0
    %267 = vmatpush1.msra.mxu0 %v240
    %268 = vmatprep.subr.mxu0 0.0
    %269 = vmatpush1.msra.mxu0 %v241
    %270 = vmatprep.subr.mxu0 0.0
    %271 = vmatpush1.msra.mxu0 %v242
    %272 = vmatprep.subr.mxu0 0.0
    %273 = vmatpush1.msra.mxu0 %v243
    %274 = vmatprep.subr.mxu0 0.0
    %275 = vmatpush1.msra.mxu0 %v244
    %276 = vmatprep.subr.mxu0 0.0
    %277 = vmatpush1.msra.mxu0 %v245
    %278 = vmatprep.subr.mxu0 0.0
    %279 = vmatpush1.msra.mxu0 %v246
    %280 = vmatprep.subr.mxu0 0.0
    %281 = vmatpush1.msra.mxu0 %v247
    %282 = vmatprep.subr.mxu0 0.0
    %283 = vmatpush1.msra.mxu0 %v248
    %284 = vmatprep.subr.mxu0 0.0
    %285 = vmatpush1.msra.mxu0 %v249
    %286 = vmatprep.subr.mxu0 0.0
    %287 = vmatpush1.msra.mxu0 %v250
    %288 = vmatprep.subr.mxu0 0.0
    %289 = vmatpush1.msra.mxu0 %v251
    %290 = vmatprep.subr.mxu0 0.0
    %291 = vmatpush1.msra.mxu0 %v252
    %292 = vmatprep.subr.mxu0 0.0
    %293 = vmatpush1.msra.mxu0 %v253
    %294 = vmatprep.subr.mxu0 0.0
    %295 = vmatpush1.msra.mxu0 0.0
    %296 = vmatprep.subr.mxu0 0.0
    %297 = vmatpush1.msra.mxu0 0.0
    %298 = vmatprep.subr.mxu0 0.0
    %299 = vmatpush1.msra.mxu0 0.0
    %300 = vmatprep.subr.mxu0 0.0
    %301 = vmatpush1.msra.mxu0 0.0
    %302 = vmatprep.subr.mxu0 0.0
    %303 = vmatpush1.msra.mxu0 0.0
    %304 = vmatprep.subr.mxu0 0.0
    %305 = vmatpush1.msra.mxu0 0.0
    %306 = vmatprep.subr.mxu0 0.0
    %307 = vmatpush1.msra.mxu0 0.0
    %308 = vmatprep.subr.mxu0 0.0
    %309 = vmatpush1.msra.mxu0 0.0
    %310 = vmatprep.subr.mxu0 0.0
    %311 = vmatpush1.msra.mxu0 0.0
    %312 = vmatprep.subr.mxu0 0.0
    %313 = vmatpush1.msra.mxu0 0.0
    %314 = vmatprep.subr.mxu0 0.0
    %315 = vmatpush1.msra.mxu0 0.0
    %316 = vmatprep.subr.mxu0 0.0
    %317 = vmatpush1.msra.mxu0 0.0
    %318 = vmatprep.subr.mxu0 0.0
    %319 = vmatpush1.msra.mxu0 0.0
    %320 = vmatprep.subr.mxu0 0.0
    %321 = vmatpush1.msra.mxu0 0.0
    %322 = vmatprep.subr.mxu0 0.0
    %323 = vmatpush1.msra.mxu0 0.0
    %324 = vmatprep.subr.mxu0 0.0
    %325 = vmatpush1.msra.mxu0 0.0
    %326 = vmatprep.mubr.f32.mxu0 0.0
    %327 = vmatmul.mubr.f32.gmra.mrb[0].mxu0 %v236
    %v328 = vpop.f32.mrb[0].mxu0
    %v329 = vadd.f32 %v260, %v328
    %v330 = vpop.f32.mrb[0].mxu0
    %331 = vdwg.mxu0
    %v332 = vmax.f32 %v329, 0.0
    %s333 = scalar_lea.vmem [#allocation7], 256
    %v334 = vld [vmem:[%s333] sm:$0xff]
    %v335 = vld [vmem:[%s333 + $0x8] sm:$0xff]
    %v336 = vld [vmem:[%s333 + $0x10] sm:$0xff]
    %v337 = vld [vmem:[%s333 + $0x18] sm:$0xff]
    %v338 = vld [vmem:[%s333 + $0x20] sm:$0xff]
    %v339 = vld [vmem:[%s333 + $0x28] sm:$0xff]
    %v340 = vld [vmem:[%s333 + $0x30] sm:$0xff]
    %v341 = vld [vmem:[%s333 + $0x38] sm:$0xff]
    %v342 = vld [vmem:[%s333 + $0x40] sm:$0xff]
    %v343 = vld [vmem:[%s333 + $0x48] sm:$0xff]
    %v344 = vld [vmem:[%s333 + $0x50] sm:$0xff]
    %v345 = vld [vmem:[%s333 + $0x58] sm:$0xff]
    %v346 = vld [vmem:[%s333 + $0x60] sm:$0xff]
    %v347 = vld [vmem:[%s333 + $0x68] sm:$0xff]
    %v348 = vld [vmem:[%s333 + $0x70] sm:$0xff]
    %v349 = vld [vmem:[%s333 + $0x78] sm:$0xff]
    %s350 = scalar_lea.vmem %s3, 3
    %v351 = vld [vmem:[%s350] sm:$0x1]
    %v353 = vlaneseq
    %v354 = vshrl.u32 %v353, 7
    %v355 = vsub.s32 0, %v354
    %v356 = vrot.slane %v351, %v355
    %358 = vmatprep.subr.mxu0 0.0
    %359 = vmatpush1.msra.mxu0 %v334
    %360 = vmatprep.subr.mxu0 0.0
    %361 = vmatpush1.msra.mxu0 %v335
    %362 = vmatprep.subr.mxu0 0.0
    %363 = vmatpush1.msra.mxu0 %v336
    %364 = vmatprep.subr.mxu0 0.0
    %365 = vmatpush1.msra.mxu0 %v337
    %366 = vmatprep.subr.mxu0 0.0
    %367 = vmatpush1.msra.mxu0 %v338
    %368 = vmatprep.subr.mxu0 0.0
    %369 = vmatpush1.msra.mxu0 %v339
    %370 = vmatprep.subr.mxu0 0.0
    %371 = vmatpush1.msra.mxu0 %v340
    %372 = vmatprep.subr.mxu0 0.0
    %373 = vmatpush1.msra.mxu0 %v341
    %374 = vmatprep.subr.mxu0 0.0
    %375 = vmatpush1.msra.mxu0 %v342
    %376 = vmatprep.subr.mxu0 0.0
    %377 = vmatpush1.msra.mxu0 %v343
    %378 = vmatprep.subr.mxu0 0.0
    %379 = vmatpush1.msra.mxu0 %v344
    %380 = vmatprep.subr.mxu0 0.0
    %381 = vmatpush1.msra.mxu0 %v345
    %382 = vmatprep.subr.mxu0 0.0
    %383 = vmatpush1.msra.mxu0 %v346
    %384 = vmatprep.subr.mxu0 0.0
    %385 = vmatpush1.msra.mxu0 %v347
    %386 = vmatprep.subr.mxu0 0.0
    %387 = vmatpush1.msra.mxu0 %v348
    %388 = vmatprep.subr.mxu0 0.0
    %389 = vmatpush1.msra.mxu0 %v349
    %390 = vmatprep.subr.mxu0 0.0
    %391 = vmatpush1.msra.mxu0 0.0
    %392 = vmatprep.subr.mxu0 0.0
    %393 = vmatpush1.msra.mxu0 0.0
    %394 = vmatprep.subr.mxu0 0.0
    %395 = vmatpush1.msra.mxu0 0.0
    %396 = vmatprep.subr.mxu0 0.0
    %397 = vmatpush1.msra.mxu0 0.0
    %398 = vmatprep.subr.mxu0 0.0
    %399 = vmatpush1.msra.mxu0 0.0
    %400 = vmatprep.subr.mxu0 0.0
    %401 = vmatpush1.msra.mxu0 0.0
    %402 = vmatprep.subr.mxu0 0.0
    %403 = vmatpush1.msra.mxu0 0.0
    %404 = vmatprep.subr.mxu0 0.0
    %405 = vmatpush1.msra.mxu0 0.0
    %406 = vmatprep.subr.mxu0 0.0
    %407 = vmatpush1.msra.mxu0 0.0
    %408 = vmatprep.subr.mxu0 0.0
    %409 = vmatpush1.msra.mxu0 0.0
    %410 = vmatprep.subr.mxu0 0.0
    %411 = vmatpush1.msra.mxu0 0.0
    %412 = vmatprep.subr.mxu0 0.0
    %413 = vmatpush1.msra.mxu0 0.0
    %414 = vmatprep.subr.mxu0 0.0
    %415 = vmatpush1.msra.mxu0 0.0
    %416 = vmatprep.subr.mxu0 0.0
    %417 = vmatpush1.msra.mxu0 0.0
    %418 = vmatprep.subr.mxu0 0.0
    %419 = vmatpush1.msra.mxu0 0.0
    %420 = vmatprep.subr.mxu0 0.0
    %421 = vmatpush1.msra.mxu0 0.0
    %422 = vmatprep.mubr.f32.mxu0 0.0
    %423 = vmatmul.mubr.f32.gmra.mrb[0].mxu0 %v332
    %v424 = vpop.f32.mrb[0].mxu0
    %v425 = vadd.f32 %v356, %v424
    %v426 = vpop.f32.mrb[0].mxu0
    %427 = vdwg.mxu0
    %428 = vst [vmem:[#allocation8] sm:$0xff] %v425
    // Predicated region
    $region30: #{mlp_forward_fused.1} parent=1 // pred_check
      _
    $region31: #{mlp_forward_fused.1} parent=1 // pred_check_branch
      %430 = sbr.rel (0) target = $region33
    $region32: #{mlp_forward_fused.1} parent=1 // pred_region
      %s432 = ssub.s32 128, 128
      %433 = vsyncadd [#allocation4], %s432
      %s435 = sshll.u32 [#allocation8], 4
      %s436 = int_to_ptr.vmem [resolvable:$true] %s435
      %438 = dma.vmem_to_hbm [thread:$0]  %s436, 128, %s4, [#allocation4]
    $region33: #{mlp_forward_fused.1} parent=1 // pred_fallthru
      _
    // Predicated region
    $region34: #{mlp_forward_fused.1} parent=1 // pred_check
      _
    $region35: #{mlp_forward_fused.1} parent=1 // pred_check_branch
      %440 = sbr.rel (0) target = $region37
    $region36: #{mlp_forward_fused.1} parent=1 // pred_region
      %441 = dma.done [#allocation4], 128
    $region37: #{mlp_forward_fused.1} parent=1 // pred_fallthru
      _
    %442 = vsyncpa [#allocation3], 1
    %443 = vsyncpa [#allocation6], 1
    %444 = vsyncpa [#allocation4], 1

</llo_original>
